<compile_context>
chip_gen: v7x
topology: tpu7x:2x2x1
jax: 0.10.0
libtpu: 0.0.40
codegen_flags: <defaults>
</compile_context>

<pallas_src>
from functools import partial

import jax
import jax.numpy as jnp
from jax.experimental import pallas as pl
from jax.experimental.pallas import tpu as pltpu


def _downsampler_kernel(p_ref, w_ref, gp_ref, bp_ref, gc_ref, bc_ref, o_ref,
                        sum_p, ssq_p, sum_c, ssq_c, *, Cin, inv_m, eps):
    """
    p_ref  : [9, Cin, tile]  bf16  per-tap patches for this (n, hw-tile) block
    w_ref  : [9, Cconv, Cin] bf16  conv weight, per tap (resident)
    gp/bp  : [Cin, 1]   f32        BN gamma/beta for the pooled channels
    gc/bc  : [Cconv, 1] f32        BN gamma/beta for the conv channels
    o_ref  : [Cout, tile]          output block (channels on sublanes, pixels on lanes)
    sum_*/ssq_* : VMEM scratch accumulators for split-stat BN (persist over grid)
    """
    ph = pl.program_id(0)

    @pl.when((ph == 0) & (pl.program_id(1) == 0) & (pl.program_id(2) == 0))
    def _init():
        sum_p[...] = jnp.zeros_like(sum_p)
        ssq_p[...] = jnp.zeros_like(ssq_p)
        sum_c[...] = jnp.zeros_like(sum_c)
        ssq_c[...] = jnp.zeros_like(ssq_c)

    # ---- load each tap once; 3x3/stride-2 conv = 9 small accumulating MXU dots,
    #      2x2 max-pool = elementwise max of taps 4,5,7,8 (never touch the pad).
    conv = None
    pool_taps = []
    for t in range(9):
        tap = p_ref[t]                                        # [Cin, tile], aligned load
        d = jnp.dot(w_ref[t], tap, preferred_element_type=jnp.float32)
        conv = d if conv is None else conv + d                # [Cconv, tile] f32
        if t in (4, 5, 7, 8):
            pool_taps.append(tap)
    pooled = jnp.maximum(jnp.maximum(pool_taps[0], pool_taps[1]),
                         jnp.maximum(pool_taps[2], pool_taps[3]))
    pooled = pooled.astype(jnp.float32)                       # [Cin, tile]

    # ---- phase 0: accumulate per-channel batch statistics (single pass) --------
    @pl.when(ph == 0)
    def _stats():
        sum_p[...] += jnp.sum(pooled, axis=1, keepdims=True)
        ssq_p[...] += jnp.sum(pooled * pooled, axis=1, keepdims=True)
        sum_c[...] += jnp.sum(conv, axis=1, keepdims=True)
        ssq_c[...] += jnp.sum(conv * conv, axis=1, keepdims=True)

    # ---- phase 1: BN (biased batch var) + Dropout2d(p=0)==id + ReLU + store ----
    @pl.when(ph == 1)
    def _normalize():
        mean_p = sum_p[...] * inv_m
        var_p = ssq_p[...] * inv_m - mean_p * mean_p
        scale_p = gp_ref[...] * jax.lax.rsqrt(var_p + eps)
        shift_p = bp_ref[...] - mean_p * scale_p

        mean_c = sum_c[...] * inv_m
        var_c = ssq_c[...] * inv_m - mean_c * mean_c
        scale_c = gc_ref[...] * jax.lax.rsqrt(var_c + eps)
        shift_c = bc_ref[...] - mean_c * scale_c

        o_ref[:Cin, :] = jnp.maximum(pooled * scale_p + shift_p, 0.0).astype(o_ref.dtype)
        o_ref[Cin:, :] = jnp.maximum(conv * scale_c + shift_c, 0.0).astype(o_ref.dtype)


def _pick_tile(hw, max_tile):
    """Largest lane-dense tile: hw itself if small, else a multiple of 128 dividing hw."""
    if hw <= max_tile:
        return hw
    t = (max_tile // 128) * 128
    while t >= 128:
        if hw % t == 0:
            return t
        t -= 128
    return hw


def downsampler_forward(x_nchw, conv_w_oihw, bn_gamma, bn_beta, *, eps=1e-5,
                        compute_dtype=jnp.bfloat16, max_tile_hw=1024):
    """x: [N, Cin, H, W] -> [N, Cout, H//2, W//2] with Cout = Cin + Cconv."""
    N, Cin, H, W = x_nchw.shape
    Cconv = conv_w_oihw.shape[0]
    Cout = Cin + Cconv
    assert H % 2 == 0 and W % 2 == 0, "ERFNet Downsampler expects even H, W"
    Ho, Wo = H // 2, W // 2
    HW = Ho * Wo
    M = N * HW

    # ---- wrapper: layout plumbing only (pad + per-tap stack), in bf16 ----------
    xb = x_nchw.astype(compute_dtype)
    xp = jnp.pad(xb, ((0, 0), (0, 0), (1, 1), (1, 1)))        # conv pad=1 halo
    taps = [xp[:, :, ki:ki + 2 * Ho:2, kj:kj + 2 * Wo:2]      # each [N, Cin, Ho, Wo]
            for ki in range(3) for kj in range(3)]
    slab = jnp.stack(taps, axis=1).reshape(N, 9, Cin, HW)     # [N, 9, Cin, Ho*Wo]

    wt = jnp.transpose(conv_w_oihw, (2, 3, 0, 1)).reshape(9, Cconv, Cin)
    wt = wt.astype(compute_dtype)                             # [9, Cconv, Cin]
    g = bn_gamma.astype(jnp.float32)
    b = bn_beta.astype(jnp.float32)
    gp, bp = g[:Cin].reshape(Cin, 1), b[:Cin].reshape(Cin, 1)
    gc, bc = g[Cin:].reshape(Cconv, 1), b[Cin:].reshape(Cconv, 1)

    tile = _pick_tile(HW, max_tile_hw)
    n_tiles = HW // tile
    grid = (2, N, n_tiles)        # (BN phase, batch, hw-tile); phase-major iteration

    kernel = partial(_downsampler_kernel, Cin=Cin, inv_m=1.0 / M, eps=eps)

    out = pl.pallas_call(
        kernel,
        out_shape=jax.ShapeDtypeStruct((N, Cout, HW), x_nchw.dtype),
        grid=grid,
        in_specs=[
            pl.BlockSpec((None, 9, Cin, tile), lambda ph, n, t: (n, 0, 0, t)),
            pl.BlockSpec((9, Cconv, Cin), lambda ph, n, t: (0, 0, 0)),   # resident
            pl.BlockSpec((Cin, 1), lambda ph, n, t: (0, 0)),
            pl.BlockSpec((Cin, 1), lambda ph, n, t: (0, 0)),
            pl.BlockSpec((Cconv, 1), lambda ph, n, t: (0, 0)),
            pl.BlockSpec((Cconv, 1), lambda ph, n, t: (0, 0)),
        ],
        # Phase 0 pins the output block so no garbage tiles are written back;
        # phase 1 writes every (n, tile) block exactly once.
        out_specs=pl.BlockSpec((None, Cout, tile),
                               lambda ph, n, t: (n * ph, 0, t * ph)),
        scratch_shapes=[pltpu.VMEM((Cin, 1), jnp.float32),
                        pltpu.VMEM((Cin, 1), jnp.float32),
                        pltpu.VMEM((Cconv, 1), jnp.float32),
                        pltpu.VMEM((Cconv, 1), jnp.float32)],
        compiler_params=pltpu.CompilerParams(
            dimension_semantics=("arbitrary", "arbitrary", "arbitrary"),
            vmem_limit_bytes=32 * 1024 * 1024),
    )(slab, wt, gp, bp, gc, bc)

    # [N, Cout, Ho*Wo] -> [N, Cout, Ho, Wo] (pure reshape, no transpose round-trip)
    return out.reshape(N, Cout, Ho, Wo)


def _reference(x, w, gamma, beta, eps=1e-5):
    """Pure-JAX reference of the PyTorch module (training-mode BN)."""
    pool = jax.lax.reduce_window(x, -jnp.inf, jax.lax.max,
                                 (1, 1, 2, 2), (1, 1, 2, 2), "VALID")
    conv = jax.lax.conv_general_dilated(
        x, w, window_strides=(2, 2), padding=((1, 1), (1, 1)),
        dimension_numbers=("NCHW", "OIHW", "NCHW"))
    f = jnp.concatenate([pool, conv], axis=1)
    mean = jnp.mean(f, axis=(0, 2, 3), keepdims=True)
    var = jnp.mean((f - mean) ** 2, axis=(0, 2, 3), keepdims=True)
    y = (f - mean) * jax.lax.rsqrt(var + eps) * gamma.reshape(1, -1, 1, 1) \
        + beta.reshape(1, -1, 1, 1)
    return jnp.maximum(y, 0.0)


if __name__ == "__main__":
    # Downsampler(in_channels=4, out_channels=16, dropout_prob=0.0)
    N, Cin, H, W = 2, 4, 16, 16
    out_channels = 16
    Cconv = out_channels - Cin

    key = jax.random.PRNGKey(0)
    kx, kw, kg, kb = jax.random.split(key, 4)
    x = jax.random.normal(kx, (N, Cin, H, W), dtype=jnp.float32)
    conv_w = 0.1 * jax.random.normal(kw, (Cconv, Cin, 3, 3), dtype=jnp.float32)  # OIHW
    bn_gamma = 1.0 + 0.1 * jax.random.normal(kg, (out_channels,), dtype=jnp.float32)
    bn_beta = 0.1 * jax.random.normal(kb, (out_channels,), dtype=jnp.float32)

    fwd = jax.jit(downsampler_forward)
    y = fwd(x, conv_w, bn_gamma, bn_beta)
    jax.block_until_ready(y)
    assert y.shape == (N, out_channels, H // 2, W // 2), y.shape

    # bf16 tap slab + default (bf16-pass) MXU precision in both the kernel and the
    # XLA reference conv give ~1e-2 abs error; real indexing/BN bugs are O(1).
    y_ref = _reference(x, conv_w, bn_gamma, bn_beta)
    max_err = float(jnp.max(jnp.abs(y - y_ref)))
    assert max_err < 3e-2, max_err

    print("KERNEL_OK")
</pallas_src>

<mosaic_0001>
module attributes {stable_mosaic.version = 11 : i64} {
  func.func @_downsampler_kernel(%arg0: i32, %arg1: i32, %arg2: i32, %arg3: memref<1x9x4x64xbf16, #tpu.memory_space<vmem>>, %arg4: memref<9x12x4xbf16, #tpu.memory_space<vmem>>, %arg5: memref<4x1xf32, #tpu.memory_space<vmem>>, %arg6: memref<4x1xf32, #tpu.memory_space<vmem>>, %arg7: memref<12x1xf32, #tpu.memory_space<vmem>>, %arg8: memref<12x1xf32, #tpu.memory_space<vmem>>, %arg9: memref<1x16x64xf32, #tpu.memory_space<vmem>>, %arg10: memref<4x1xf32, #tpu.memory_space<vmem>>, %arg11: memref<4x1xf32, #tpu.memory_space<vmem>>, %arg12: memref<12x1xf32, #tpu.memory_space<vmem>>, %arg13: memref<12x1xf32, #tpu.memory_space<vmem>>) attributes {dimension_semantics = [#tpu.dimension_semantics<arbitrary>, #tpu.dimension_semantics<arbitrary>, #tpu.dimension_semantics<arbitrary>], iteration_bounds = array<i64: 2, 2, 1>, scalar_prefetch = 0 : i64, scratch_operands = 4 : i64, tpu.core_type = #tpu.core_type<tc>, window_params = [{transform_indices = @transform_0, window_bounds = array<i64: 1, 9, 4, 64>}, {pipeline_mode = #tpu.pipeline_mode<synchronous>, transform_indices = @transform_1, window_bounds = array<i64: 9, 12, 4>}, {pipeline_mode = #tpu.pipeline_mode<synchronous>, transform_indices = @transform_2, window_bounds = array<i64: 4, 1>}, {pipeline_mode = #tpu.pipeline_mode<synchronous>, transform_indices = @transform_3, window_bounds = array<i64: 4, 1>}, {pipeline_mode = #tpu.pipeline_mode<synchronous>, transform_indices = @transform_4, window_bounds = array<i64: 12, 1>}, {pipeline_mode = #tpu.pipeline_mode<synchronous>, transform_indices = @transform_5, window_bounds = array<i64: 12, 1>}, {transform_indices = @transform_6, window_bounds = array<i64: 1, 16, 64>}]} {
    %c0_i32 = arith.constant 0 : i32
    %0 = arith.cmpi eq, %arg0, %c0_i32 : i32
    %c0_i32_0 = arith.constant 0 : i32
    %1 = arith.cmpi eq, %arg1, %c0_i32_0 : i32
    %2 = arith.andi %0, %1 : i1
    %c0_i32_1 = arith.constant 0 : i32
    %3 = arith.cmpi eq, %arg2, %c0_i32_1 : i32
    %4 = arith.andi %2, %3 : i1
    %5 = arith.extui %4 : i1 to i32
    %c0_i32_2 = arith.constant 0 : i32
    %6 = arith.cmpi ne, %5, %c0_i32_2 : i32
    scf.if %6 {
      %cst_68 = arith.constant 0.000000e+00 : f32
      %70 = vector.broadcast %cst_68 : f32 to vector<4x1xf32>
      %c0_69 = arith.constant 0 : index
      %c0_70 = arith.constant 0 : index
      %71 = vector.load %arg10[%c0_69, %c0_70] : memref<4x1xf32, #tpu.memory_space<vmem>>, vector<4x1xf32>
      tpu.vector_store %arg10[%c0_69, %c0_70], %70 {strides = array<i32>} : memref<4x1xf32, #tpu.memory_space<vmem>>, vector<4x1xf32>,
      %cst_71 = arith.constant 0.000000e+00 : f32
      %72 = vector.broadcast %cst_71 : f32 to vector<4x1xf32>
      %c0_72 = arith.constant 0 : index
      %c0_73 = arith.constant 0 : index
      %73 = vector.load %arg11[%c0_72, %c0_73] : memref<4x1xf32, #tpu.memory_space<vmem>>, vector<4x1xf32>
      tpu.vector_store %arg11[%c0_72, %c0_73], %72 {strides = array<i32>} : memref<4x1xf32, #tpu.memory_space<vmem>>, vector<4x1xf32>,
      %cst_74 = arith.constant 0.000000e+00 : f32
      %74 = vector.broadcast %cst_74 : f32 to vector<12x1xf32>
      %c0_75 = arith.constant 0 : index
      %c0_76 = arith.constant 0 : index
      %75 = vector.load %arg12[%c0_75, %c0_76] : memref<12x1xf32, #tpu.memory_space<vmem>>, vector<12x1xf32>
      tpu.vector_store %arg12[%c0_75, %c0_76], %74 {strides = array<i32>} : memref<12x1xf32, #tpu.memory_space<vmem>>, vector<12x1xf32>,
      %cst_77 = arith.constant 0.000000e+00 : f32
      %76 = vector.broadcast %cst_77 : f32 to vector<12x1xf32>
      %c0_78 = arith.constant 0 : index
      %c0_79 = arith.constant 0 : index
      %77 = vector.load %arg13[%c0_78, %c0_79] : memref<12x1xf32, #tpu.memory_space<vmem>>, vector<12x1xf32>
      tpu.vector_store %arg13[%c0_78, %c0_79], %76 {strides = array<i32>} : memref<12x1xf32, #tpu.memory_space<vmem>>, vector<12x1xf32>,
    } else {
    }
    %c0 = arith.constant 0 : index
    %c0_3 = arith.constant 0 : index
    %c0_4 = arith.constant 0 : index
    %c0_5 = arith.constant 0 : index
    %7 = vector.load %arg3[%c0, %c0_3, %c0_4, %c0_5] : memref<1x9x4x64xbf16, #tpu.memory_space<vmem>>, vector<1x1x4x64xbf16>
    %8 = vector.shape_cast %7 : vector<1x1x4x64xbf16> to vector<4x64xbf16>
    %c0_6 = arith.constant 0 : index
    %c0_7 = arith.constant 0 : index
    %c0_8 = arith.constant 0 : index
    %9 = vector.load %arg4[%c0_6, %c0_7, %c0_8] : memref<9x12x4xbf16, #tpu.memory_space<vmem>>, vector<1x12x4xbf16>
    %10 = vector.shape_cast %9 : vector<1x12x4xbf16> to vector<12x4xbf16>
    %cst = arith.constant dense<0.000000e+00> : vector<12x64xf32>
    %11 = tpu.matmul %10, %8, %cst {dimension_numbers = #tpu.dot_dimension_numbers<[1], [0], [0], [1], [0, 0, 1, 1], [], []>} : vector<12x4xbf16>, vector<4x64xbf16>, vector<12x64xf32> -> vector<12x64xf32>
    %c0_9 = arith.constant 0 : index
    %c1 = arith.constant 1 : index
    %c0_10 = arith.constant 0 : index
    %c0_11 = arith.constant 0 : index
    %12 = vector.load %arg3[%c0_9, %c1, %c0_10, %c0_11] : memref<1x9x4x64xbf16, #tpu.memory_space<vmem>>, vector<1x1x4x64xbf16>
    %13 = vector.shape_cast %12 : vector<1x1x4x64xbf16> to vector<4x64xbf16>
    %c1_12 = arith.constant 1 : index
    %c0_13 = arith.constant 0 : index
    %c0_14 = arith.constant 0 : index
    %14 = vector.load %arg4[%c1_12, %c0_13, %c0_14] : memref<9x12x4xbf16, #tpu.memory_space<vmem>>, vector<1x12x4xbf16>
    %15 = vector.shape_cast %14 : vector<1x12x4xbf16> to vector<12x4xbf16>
    %cst_15 = arith.constant dense<0.000000e+00> : vector<12x64xf32>
    %16 = tpu.matmul %15, %13, %cst_15 {dimension_numbers = #tpu.dot_dimension_numbers<[1], [0], [0], [1], [0, 0, 1, 1], [], []>} : vector<12x4xbf16>, vector<4x64xbf16>, vector<12x64xf32> -> vector<12x64xf32>
    %17 = arith.addf %11, %16 : vector<12x64xf32>
    %c0_16 = arith.constant 0 : index
    %c2 = arith.constant 2 : index
    %c0_17 = arith.constant 0 : index
    %c0_18 = arith.constant 0 : index
    %18 = vector.load %arg3[%c0_16, %c2, %c0_17, %c0_18] : memref<1x9x4x64xbf16, #tpu.memory_space<vmem>>, vector<1x1x4x64xbf16>
    %19 = vector.shape_cast %18 : vector<1x1x4x64xbf16> to vector<4x64xbf16>
    %c2_19 = arith.constant 2 : index
    %c0_20 = arith.constant 0 : index
    %c0_21 = arith.constant 0 : index
    %20 = vector.load %arg4[%c2_19, %c0_20, %c0_21] : memref<9x12x4xbf16, #tpu.memory_space<vmem>>, vector<1x12x4xbf16>
    %21 = vector.shape_cast %20 : vector<1x12x4xbf16> to vector<12x4xbf16>
    %cst_22 = arith.constant dense<0.000000e+00> : vector<12x64xf32>
    %22 = tpu.matmul %21, %19, %cst_22 {dimension_numbers = #tpu.dot_dimension_numbers<[1], [0], [0], [1], [0, 0, 1, 1], [], []>} : vector<12x4xbf16>, vector<4x64xbf16>, vector<12x64xf32> -> vector<12x64xf32>
    %23 = arith.addf %17, %22 : vector<12x64xf32>
    %c0_23 = arith.constant 0 : index
    %c3 = arith.constant 3 : index
    %c0_24 = arith.constant 0 : index
    %c0_25 = arith.constant 0 : index
    %24 = vector.load %arg3[%c0_23, %c3, %c0_24, %c0_25] : memref<1x9x4x64xbf16, #tpu.memory_space<vmem>>, vector<1x1x4x64xbf16>
    %25 = vector.shape_cast %24 : vector<1x1x4x64xbf16> to vector<4x64xbf16>
    %c3_26 = arith.constant 3 : index
    %c0_27 = arith.constant 0 : index
    %c0_28 = arith.constant 0 : index
    %26 = vector.load %arg4[%c3_26, %c0_27, %c0_28] : memref<9x12x4xbf16, #tpu.memory_space<vmem>>, vector<1x12x4xbf16>
    %27 = vector.shape_cast %26 : vector<1x12x4xbf16> to vector<12x4xbf16>
    %cst_29 = arith.constant dense<0.000000e+00> : vector<12x64xf32>
    %28 = tpu.matmul %27, %25, %cst_29 {dimension_numbers = #tpu.dot_dimension_numbers<[1], [0], [0], [1], [0, 0, 1, 1], [], []>} : vector<12x4xbf16>, vector<4x64xbf16>, vector<12x64xf32> -> vector<12x64xf32>
    %29 = arith.addf %23, %28 : vector<12x64xf32>
    %c0_30 = arith.constant 0 : index
    %c4 = arith.constant 4 : index
    %c0_31 = arith.constant 0 : index
    %c0_32 = arith.constant 0 : index
    %30 = vector.load %arg3[%c0_30, %c4, %c0_31, %c0_32] : memref<1x9x4x64xbf16, #tpu.memory_space<vmem>>, vector<1x1x4x64xbf16>
    %31 = vector.shape_cast %30 : vector<1x1x4x64xbf16> to vector<4x64xbf16>
    %c4_33 = arith.constant 4 : index
    %c0_34 = arith.constant 0 : index
    %c0_35 = arith.constant 0 : index
    %32 = vector.load %arg4[%c4_33, %c0_34, %c0_35] : memref<9x12x4xbf16, #tpu.memory_space<vmem>>, vector<1x12x4xbf16>
    %33 = vector.shape_cast %32 : vector<1x12x4xbf16> to vector<12x4xbf16>
    %cst_36 = arith.constant dense<0.000000e+00> : vector<12x64xf32>
    %34 = tpu.matmul %33, %31, %cst_36 {dimension_numbers = #tpu.dot_dimension_numbers<[1], [0], [0], [1], [0, 0, 1, 1], [], []>} : vector<12x4xbf16>, vector<4x64xbf16>, vector<12x64xf32> -> vector<12x64xf32>
    %35 = arith.addf %29, %34 : vector<12x64xf32>
    %c0_37 = arith.constant 0 : index
    %c5 = arith.constant 5 : index
    %c0_38 = arith.constant 0 : index
    %c0_39 = arith.constant 0 : index
    %36 = vector.load %arg3[%c0_37, %c5, %c0_38, %c0_39] : memref<1x9x4x64xbf16, #tpu.memory_space<vmem>>, vector<1x1x4x64xbf16>
    %37 = vector.shape_cast %36 : vector<1x1x4x64xbf16> to vector<4x64xbf16>
    %c5_40 = arith.constant 5 : index
    %c0_41 = arith.constant 0 : index
    %c0_42 = arith.constant 0 : index
    %38 = vector.load %arg4[%c5_40, %c0_41, %c0_42] : memref<9x12x4xbf16, #tpu.memory_space<vmem>>, vector<1x12x4xbf16>
    %39 = vector.shape_cast %38 : vector<1x12x4xbf16> to vector<12x4xbf16>
    %cst_43 = arith.constant dense<0.000000e+00> : vector<12x64xf32>
    %40 = tpu.matmul %39, %37, %cst_43 {dimension_numbers = #tpu.dot_dimension_numbers<[1], [0], [0], [1], [0, 0, 1, 1], [], []>} : vector<12x4xbf16>, vector<4x64xbf16>, vector<12x64xf32> -> vector<12x64xf32>
    %41 = arith.addf %35, %40 : vector<12x64xf32>
    %c0_44 = arith.constant 0 : index
    %c6 = arith.constant 6 : index
    %c0_45 = arith.constant 0 : index
    %c0_46 = arith.constant 0 : index
    %42 = vector.load %arg3[%c0_44, %c6, %c0_45, %c0_46] : memref<1x9x4x64xbf16, #tpu.memory_space<vmem>>, vector<1x1x4x64xbf16>
    %43 = vector.shape_cast %42 : vector<1x1x4x64xbf16> to vector<4x64xbf16>
    %c6_47 = arith.constant 6 : index
    %c0_48 = arith.constant 0 : index
    %c0_49 = arith.constant 0 : index
    %44 = vector.load %arg4[%c6_47, %c0_48, %c0_49] : memref<9x12x4xbf16, #tpu.memory_space<vmem>>, vector<1x12x4xbf16>
    %45 = vector.shape_cast %44 : vector<1x12x4xbf16> to vector<12x4xbf16>
    %cst_50 = arith.constant dense<0.000000e+00> : vector<12x64xf32>
    %46 = tpu.matmul %45, %43, %cst_50 {dimension_numbers = #tpu.dot_dimension_numbers<[1], [0], [0], [1], [0, 0, 1, 1], [], []>} : vector<12x4xbf16>, vector<4x64xbf16>, vector<12x64xf32> -> vector<12x64xf32>
    %47 = arith.addf %41, %46 : vector<12x64xf32>
    %c0_51 = arith.constant 0 : index
    %c7 = arith.constant 7 : index
    %c0_52 = arith.constant 0 : index
    %c0_53 = arith.constant 0 : index
    %48 = vector.load %arg3[%c0_51, %c7, %c0_52, %c0_53] : memref<1x9x4x64xbf16, #tpu.memory_space<vmem>>, vector<1x1x4x64xbf16>
    %49 = vector.shape_cast %48 : vector<1x1x4x64xbf16> to vector<4x64xbf16>
    %c7_54 = arith.constant 7 : index
    %c0_55 = arith.constant 0 : index
    %c0_56 = arith.constant 0 : index
    %50 = vector.load %arg4[%c7_54, %c0_55, %c0_56] : memref<9x12x4xbf16, #tpu.memory_space<vmem>>, vector<1x12x4xbf16>
    %51 = vector.shape_cast %50 : vector<1x12x4xbf16> to vector<12x4xbf16>
    %cst_57 = arith.constant dense<0.000000e+00> : vector<12x64xf32>
    %52 = tpu.matmul %51, %49, %cst_57 {dimension_numbers = #tpu.dot_dimension_numbers<[1], [0], [0], [1], [0, 0, 1, 1], [], []>} : vector<12x4xbf16>, vector<4x64xbf16>, vector<12x64xf32> -> vector<12x64xf32>
    %53 = arith.addf %47, %52 : vector<12x64xf32>
    %c0_58 = arith.constant 0 : index
    %c8 = arith.constant 8 : index
    %c0_59 = arith.constant 0 : index
    %c0_60 = arith.constant 0 : index
    %54 = vector.load %arg3[%c0_58, %c8, %c0_59, %c0_60] : memref<1x9x4x64xbf16, #tpu.memory_space<vmem>>, vector<1x1x4x64xbf16>
    %55 = vector.shape_cast %54 : vector<1x1x4x64xbf16> to vector<4x64xbf16>
    %c8_61 = arith.constant 8 : index
    %c0_62 = arith.constant 0 : index
    %c0_63 = arith.constant 0 : index
    %56 = vector.load %arg4[%c8_61, %c0_62, %c0_63] : memref<9x12x4xbf16, #tpu.memory_space<vmem>>, vector<1x12x4xbf16>
    %57 = vector.shape_cast %56 : vector<1x12x4xbf16> to vector<12x4xbf16>
    %cst_64 = arith.constant dense<0.000000e+00> : vector<12x64xf32>
    %58 = tpu.matmul %57, %55, %cst_64 {dimension_numbers = #tpu.dot_dimension_numbers<[1], [0], [0], [1], [0, 0, 1, 1], [], []>} : vector<12x4xbf16>, vector<4x64xbf16>, vector<12x64xf32> -> vector<12x64xf32>
    %59 = arith.addf %53, %58 : vector<12x64xf32>
    %60 = arith.maximumf %31, %37 : vector<4x64xbf16>
    %61 = arith.maximumf %49, %55 : vector<4x64xbf16>
    %62 = arith.maximumf %60, %61 : vector<4x64xbf16>
    %63 = arith.extf %62 : vector<4x64xbf16> to vector<4x64xf32>
    %c0_i32_65 = arith.constant 0 : i32
    %64 = arith.cmpi eq, %arg0, %c0_i32_65 : i32
    %65 = arith.extui %64 : i1 to i32
    %c0_i32_66 = arith.constant 0 : i32
    %66 = arith.cmpi ne, %65, %c0_i32_66 : i32
    scf.if %66 {
      %c0_68 = arith.constant 0 : index
      %c0_69 = arith.constant 0 : index
      %70 = vector.load %arg10[%c0_68, %c0_69] : memref<4x1xf32, #tpu.memory_space<vmem>>, vector<4x1xf32>
      %cst_70 = arith.constant dense<0.000000e+00> : vector<4xf32>
      %71 = vector.multi_reduction <add>, %63, %cst_70 [1] : vector<4x64xf32> to vector<4xf32>
      %72 = vector.shape_cast %71 : vector<4xf32> to vector<4x1xf32>
      %73 = arith.addf %70, %72 : vector<4x1xf32>
      %c0_71 = arith.constant 0 : index
      %c0_72 = arith.constant 0 : index
      %74 = vector.load %arg10[%c0_71, %c0_72] : memref<4x1xf32, #tpu.memory_space<vmem>>, vector<4x1xf32>
      tpu.vector_store %arg10[%c0_71, %c0_72], %73 {strides = array<i32>} : memref<4x1xf32, #tpu.memory_space<vmem>>, vector<4x1xf32>,
      %c0_73 = arith.constant 0 : index
      %c0_74 = arith.constant 0 : index
      %75 = vector.load %arg11[%c0_73, %c0_74] : memref<4x1xf32, #tpu.memory_space<vmem>>, vector<4x1xf32>
      %76 = arith.mulf %63, %63 : vector<4x64xf32>
      %cst_75 = arith.constant dense<0.000000e+00> : vector<4xf32>
      %77 = vector.multi_reduction <add>, %76, %cst_75 [1] : vector<4x64xf32> to vector<4xf32>
      %78 = vector.shape_cast %77 : vector<4xf32> to vector<4x1xf32>
      %79 = arith.addf %75, %78 : vector<4x1xf32>
      %c0_76 = arith.constant 0 : index
      %c0_77 = arith.constant 0 : index
      %80 = vector.load %arg11[%c0_76, %c0_77] : memref<4x1xf32, #tpu.memory_space<vmem>>, vector<4x1xf32>
      tpu.vector_store %arg11[%c0_76, %c0_77], %79 {strides = array<i32>} : memref<4x1xf32, #tpu.memory_space<vmem>>, vector<4x1xf32>,
      %c0_78 = arith.constant 0 : index
      %c0_79 = arith.constant 0 : index
      %81 = vector.load %arg12[%c0_78, %c0_79] : memref<12x1xf32, #tpu.memory_space<vmem>>, vector<12x1xf32>
      %cst_80 = arith.constant dense<0.000000e+00> : vector<12xf32>
      %82 = vector.multi_reduction <add>, %59, %cst_80 [1] : vector<12x64xf32> to vector<12xf32>
      %83 = vector.shape_cast %82 : vector<12xf32> to vector<12x1xf32>
      %84 = arith.addf %81, %83 : vector<12x1xf32>
      %c0_81 = arith.constant 0 : index
      %c0_82 = arith.constant 0 : index
      %85 = vector.load %arg12[%c0_81, %c0_82] : memref<12x1xf32, #tpu.memory_space<vmem>>, vector<12x1xf32>
      tpu.vector_store %arg12[%c0_81, %c0_82], %84 {strides = array<i32>} : memref<12x1xf32, #tpu.memory_space<vmem>>, vector<12x1xf32>,
      %c0_83 = arith.constant 0 : index
      %c0_84 = arith.constant 0 : index
      %86 = vector.load %arg13[%c0_83, %c0_84] : memref<12x1xf32, #tpu.memory_space<vmem>>, vector<12x1xf32>
      %87 = arith.mulf %59, %59 : vector<12x64xf32>
      %cst_85 = arith.constant dense<0.000000e+00> : vector<12xf32>
      %88 = vector.multi_reduction <add>, %87, %cst_85 [1] : vector<12x64xf32> to vector<12xf32>
      %89 = vector.shape_cast %88 : vector<12xf32> to vector<12x1xf32>
      %90 = arith.addf %86, %89 : vector<12x1xf32>
      %c0_86 = arith.constant 0 : index
      %c0_87 = arith.constant 0 : index
      %91 = vector.load %arg13[%c0_86, %c0_87] : memref<12x1xf32, #tpu.memory_space<vmem>>, vector<12x1xf32>
      tpu.vector_store %arg13[%c0_86, %c0_87], %90 {strides = array<i32>} : memref<12x1xf32, #tpu.memory_space<vmem>>, vector<12x1xf32>,
    } else {
    }
    %c1_i32 = arith.constant 1 : i32
    %67 = arith.cmpi eq, %arg0, %c1_i32 : i32
    %68 = arith.extui %67 : i1 to i32
    %c0_i32_67 = arith.constant 0 : i32
    %69 = arith.cmpi ne, %68, %c0_i32_67 : i32
    scf.if %69 {
      %c0_68 = arith.constant 0 : index
      %c0_69 = arith.constant 0 : index
      %70 = vector.load %arg10[%c0_68, %c0_69] : memref<4x1xf32, #tpu.memory_space<vmem>>, vector<4x1xf32>
      %cst_70 = arith.constant 7.812500e-03 : f32
      %71 = vector.broadcast %cst_70 : f32 to vector<4x1xf32>
      %72 = arith.mulf %70, %71 : vector<4x1xf32>
      %c0_71 = arith.constant 0 : index
      %c0_72 = arith.constant 0 : index
      %73 = vector.load %arg11[%c0_71, %c0_72] : memref<4x1xf32, #tpu.memory_space<vmem>>, vector<4x1xf32>
      %cst_73 = arith.constant 7.812500e-03 : f32
      %74 = vector.broadcast %cst_73 : f32 to vector<4x1xf32>
      %75 = arith.mulf %73, %74 : vector<4x1xf32>
      %76 = arith.mulf %72, %72 : vector<4x1xf32>
      %77 = arith.subf %75, %76 : vector<4x1xf32>
      %c0_74 = arith.constant 0 : index
      %c0_75 = arith.constant 0 : index
      %78 = vector.load %arg5[%c0_74, %c0_75] : memref<4x1xf32, #tpu.memory_space<vmem>>, vector<4x1xf32>
      %cst_76 = arith.constant 9.99999974E-6 : f32
      %79 = vector.broadcast %cst_76 : f32 to vector<4x1xf32>
      %80 = arith.addf %77, %79 : vector<4x1xf32>
      %81 = math.rsqrt %80 : vector<4x1xf32>
      %82 = arith.mulf %78, %81 : vector<4x1xf32>
      %c0_77 = arith.constant 0 : index
      %c0_78 = arith.constant 0 : index
      %83 = vector.load %arg6[%c0_77, %c0_78] : memref<4x1xf32, #tpu.memory_space<vmem>>, vector<4x1xf32>
      %84 = arith.mulf %72, %82 : vector<4x1xf32>
      %85 = arith.subf %83, %84 : vector<4x1xf32>
      %c0_79 = arith.constant 0 : index
      %c0_80 = arith.constant 0 : index
      %86 = vector.load %arg12[%c0_79, %c0_80] : memref<12x1xf32, #tpu.memory_space<vmem>>, vector<12x1xf32>
      %cst_81 = arith.constant 7.812500e-03 : f32
      %87 = vector.broadcast %cst_81 : f32 to vector<12x1xf32>
      %88 = arith.mulf %86, %87 : vector<12x1xf32>
      %c0_82 = arith.constant 0 : index
      %c0_83 = arith.constant 0 : index
      %89 = vector.load %arg13[%c0_82, %c0_83] : memref<12x1xf32, #tpu.memory_space<vmem>>, vector<12x1xf32>
      %cst_84 = arith.constant 7.812500e-03 : f32
      %90 = vector.broadcast %cst_84 : f32 to vector<12x1xf32>
      %91 = arith.mulf %89, %90 : vector<12x1xf32>
      %92 = arith.mulf %88, %88 : vector<12x1xf32>
      %93 = arith.subf %91, %92 : vector<12x1xf32>
      %c0_85 = arith.constant 0 : index
      %c0_86 = arith.constant 0 : index
      %94 = vector.load %arg7[%c0_85, %c0_86] : memref<12x1xf32, #tpu.memory_space<vmem>>, vector<12x1xf32>
      %cst_87 = arith.constant 9.99999974E-6 : f32
      %95 = vector.broadcast %cst_87 : f32 to vector<12x1xf32>
      %96 = arith.addf %93, %95 : vector<12x1xf32>
      %97 = math.rsqrt %96 : vector<12x1xf32>
      %98 = arith.mulf %94, %97 : vector<12x1xf32>
      %c0_88 = arith.constant 0 : index
      %c0_89 = arith.constant 0 : index
      %99 = vector.load %arg8[%c0_88, %c0_89] : memref<12x1xf32, #tpu.memory_space<vmem>>, vector<12x1xf32>
      %100 = arith.mulf %88, %98 : vector<12x1xf32>
      %101 = arith.subf %99, %100 : vector<12x1xf32>
      %102 = vector.broadcast %82 : vector<4x1xf32> to vector<4x64xf32>
      %103 = arith.mulf %63, %102 : vector<4x64xf32>
      %104 = vector.broadcast %85 : vector<4x1xf32> to vector<4x64xf32>
      %105 = arith.addf %103, %104 : vector<4x64xf32>
      %cst_90 = arith.constant 0.000000e+00 : f32
      %106 = vector.broadcast %cst_90 : f32 to vector<4x64xf32>
      %107 = arith.maximumf %105, %106 : vector<4x64xf32>
      %c0_91 = arith.constant 0 : index
      %c0_92 = arith.constant 0 : index
      %c0_93 = arith.constant 0 : index
      %108 = vector.load %arg9[%c0_91, %c0_92, %c0_93] : memref<1x16x64xf32, #tpu.memory_space<vmem>>, vector<1x4x64xf32>
      %109 = vector.shape_cast %108 : vector<1x4x64xf32> to vector<4x64xf32>
      %110 = vector.shape_cast %107 : vector<4x64xf32> to vector<1x4x64xf32>
      tpu.vector_store %arg9[%c0_91, %c0_92, %c0_93], %110 {strides = array<i32>} : memref<1x16x64xf32, #tpu.memory_space<vmem>>, vector<1x4x64xf32>,
      %111 = vector.broadcast %98 : vector<12x1xf32> to vector<12x64xf32>
      %112 = arith.mulf %59, %111 : vector<12x64xf32>
      %113 = vector.broadcast %101 : vector<12x1xf32> to vector<12x64xf32>
      %114 = arith.addf %112, %113 : vector<12x64xf32>
      %cst_94 = arith.constant 0.000000e+00 : f32
      %115 = vector.broadcast %cst_94 : f32 to vector<12x64xf32>
      %116 = arith.maximumf %114, %115 : vector<12x64xf32>
      %c0_95 = arith.constant 0 : index
      %c4_96 = arith.constant 4 : index
      %c0_97 = arith.constant 0 : index
      %117 = vector.load %arg9[%c0_95, %c4_96, %c0_97] : memref<1x16x64xf32, #tpu.memory_space<vmem>>, vector<1x12x64xf32>
      %118 = vector.shape_cast %117 : vector<1x12x64xf32> to vector<12x64xf32>
      %119 = vector.shape_cast %116 : vector<12x64xf32> to vector<1x12x64xf32>
      tpu.vector_store %arg9[%c0_95, %c4_96, %c0_97], %119 {strides = array<i32>} : memref<1x16x64xf32, #tpu.memory_space<vmem>>, vector<1x12x64xf32>,
    } else {
    }
    return
  }
  func.func @transform_0(%arg0: i32, %arg1: i32, %arg2: i32) -> (i32, i32, i32, i32) {
    %c0_i32 = arith.constant 0 : i32
    %c0_i32_0 = arith.constant 0 : i32
    %c0_i32_1 = arith.constant 0 : i32
    return %arg1, %c0_i32, %c0_i32_0, %arg2 : i32, i32, i32, i32
  }
  func.func @transform_1(%arg0: i32, %arg1: i32, %arg2: i32) -> (i32, i32, i32) {
    %c0_i32 = arith.constant 0 : i32
    %c0_i32_0 = arith.constant 0 : i32
    %c0_i32_1 = arith.constant 0 : i32
    %c0_i32_2 = arith.constant 0 : i32
    return %c0_i32, %c0_i32_0, %c0_i32_1 : i32, i32, i32
  }
  func.func @transform_2(%arg0: i32, %arg1: i32, %arg2: i32) -> (i32, i32) {
    %c0_i32 = arith.constant 0 : i32
    %c0_i32_0 = arith.constant 0 : i32
    %c0_i32_1 = arith.constant 0 : i32
    return %c0_i32, %c0_i32_0 : i32, i32
  }
  func.func @transform_3(%arg0: i32, %arg1: i32, %arg2: i32) -> (i32, i32) {
    %c0_i32 = arith.constant 0 : i32
    %c0_i32_0 = arith.constant 0 : i32
    %c0_i32_1 = arith.constant 0 : i32
    return %c0_i32, %c0_i32_0 : i32, i32
  }
  func.func @transform_4(%arg0: i32, %arg1: i32, %arg2: i32) -> (i32, i32) {
    %c0_i32 = arith.constant 0 : i32
    %c0_i32_0 = arith.constant 0 : i32
    %c0_i32_1 = arith.constant 0 : i32
    return %c0_i32, %c0_i32_0 : i32, i32
  }
  func.func @transform_5(%arg0: i32, %arg1: i32, %arg2: i32) -> (i32, i32) {
    %c0_i32 = arith.constant 0 : i32
    %c0_i32_0 = arith.constant 0 : i32
    %c0_i32_1 = arith.constant 0 : i32
    return %c0_i32, %c0_i32_0 : i32, i32
  }
  func.func @transform_6(%arg0: i32, %arg1: i32, %arg2: i32) -> (i32, i32, i32) {
    %0 = arith.muli %arg1, %arg0 : i32
    %1 = arith.muli %arg2, %arg0 : i32
    %c0_i32 = arith.constant 0 : i32
    %c0_i32_0 = arith.constant 0 : i32
    return %0, %c0_i32, %1 : i32, i32, i32
  }
}

</mosaic_0001>

<llo_original>
// kernel: downsampler_forward.1
$region0: #{downsampler_forward.1}
  #allocation0 [shape = 'u32[]', space=smem, size = 0x4, offset = 0x4, fixed_abs, tag = 'smem constant byte address 0x4 - core index']
  #allocation1 [shape = 'u32[144,128]{1,0:T(1,128)}', space=vmem, size = 0x12000, scoped, tag = 'internal scratch']
  #allocation2 [shape = 'f32[4,1]{1,0:T(4,128)}', space=vmem, size = 0x800, scoped, tag = 'scratch operand']
  #allocation3 [shape = 'f32[4,1]{1,0:T(4,128)}', space=vmem, size = 0x800, scoped, tag = 'scratch operand']
  #allocation4 [shape = 'f32[12,1]{1,0:T(8,128)}', space=vmem, size = 0x2000, scoped, tag = 'scratch operand']
  #allocation5 [shape = 'f32[12,1]{1,0:T(8,128)}', space=vmem, size = 0x2000, scoped, tag = 'scratch operand']
  %s0 = inlined_call_operand.vmem [shape: bf16[2,9,4,64], index: 0, kind: input, shape index: {}]
  %s1 = inlined_call_operand.vmem [shape: bf16[9,12,4], index: 1, kind: input, shape index: {}]
  %s2 = inlined_call_operand.vmem [shape: f32[4,1], index: 2, kind: input, shape index: {}]
  %s3 = inlined_call_operand.vmem [shape: f32[4,1], index: 3, kind: input, shape index: {}]
  %s4 = inlined_call_operand.vmem [shape: f32[12,1], index: 4, kind: input, shape index: {}]
  %s5 = inlined_call_operand.vmem [shape: f32[12,1], index: 5, kind: input, shape index: {}]
  %s6 = inlined_call_operand.vmem [shape: f32[2,16,64], index: 6, kind: output, shape index: {}]
  %s7 = sld [smem:[#allocation0]]
  $region69: #{downsampler_forward.1} parent=0
    _
  %s9 = ssub.s32 1, %s7
  %s10 = scalar_select 0, %s9, %s7
  loop: start=0, step=1, limit=6
  $region2: #{downsampler_forward.1} parent=0 // loop_pre_header
    _
  $region3: #{downsampler_forward.1} parent=0 // loop_header
    %s12 = sphi 0, %s16
    %p13 = scmp.ge.s32.totalorder %s12, 6
    %s19 = sphi 0, %s38
    %s20 = sphi 0, %s34
    %s21 = sphi 0, %s30
    %s22 = sphi 0, %s19
    %s23 = sphi 0, %s20
    %s24 = sphi 0, %s21
    %s25 = sphi 0, %s22
    %s26 = sphi 0, %s23
    %s27 = sphi 0, %s24
    %s43 = sphi 0, %s45
    %s46 = sphi 0, %s43
    %s47 = sphi 0, %s46
    %s63 = sphi 0, %s47
    %s67 = sphi 0, %s67
    %s69 = sphi 0, %s67
    %s70 = sphi 0, %s69
    %s84 = sphi 0, %s70
    %s88 = sphi 0, %s88
    %s90 = sphi 0, %s88
    %s91 = sphi 0, %s90
    %s105 = sphi 0, %s91
    %s109 = sphi 0, %s109
    %s111 = sphi 0, %s109
    %s112 = sphi 0, %s111
    %s126 = sphi 0, %s112
    %s130 = sphi 0, %s130
    %s132 = sphi 0, %s130
    %s133 = sphi 0, %s132
    %s147 = sphi 0, %s133
    %s151 = sphi 0, %s151
    %s153 = sphi 0, %s151
    %s154 = sphi 0, %s153
    %s168 = sphi 0, %s154
    %s180 = sphi 0, %s182
    %s183 = sphi 0, %s180
    %s184 = sphi 0, %s183
    %s200 = sphi 0, %s184
  $region4: #{downsampler_forward.1} parent=0 // loop_header_branch
    %15 = sbr.rel (%p13) target = $region8
  $region5: #{downsampler_forward.1} parent=0 // loop_body
    %s17 = ssub.s32 %s12, 1
    %s18 = ssub.s32 %s12, 2
    %s28 = sadd.s32 1, %s21
    %p29 = scmp.ge.s32.totalorder %s28, 1
    %s30 = scalar_select %p29, 0, %s28
    %s31 = sadd.s32 1, %s20
    %s32 = scalar_select %p29, %s31, %s20
    %p33 = scmp.ge.s32.totalorder %s32, 2
    %s34 = scalar_select %p33, 0, %s32
    %s35 = sadd.s32 1, %s19
    %s36 = scalar_select %p33, %s35, %s19
    %p37 = scmp.ge.s32.totalorder %s36, 2
    %s38 = scalar_select %p37, 0, %s36
    %s39 = ssub.s32 %s20, %s34
    %s40 = ssub.s32 %s21, %s30
    %s41 = sor.u32 %s39, %s40
    %p42 = scmp.eq.s32.totalorder %s41, 0
    %s44 = sadd.s32 %s43, 1
    %s45 = scalar_select %p42, %s43, %s44
    %p48 = pneg %p42
    %p49 = scmp.eq.s32.totalorder %s12, 3
    %p50 = por %p48, %p49
    %p51 = scmp.ne.s32.totalorder %s43, %s46
    %p52 = scmp.eq.s32.totalorder %s12, 0
    %p53 = por %p51, %p52
    %p54 = scmp.ne.s32.totalorder %s43, %s46
    %p55 = scmp.eq.s32.totalorder %s17, 3
    %p56 = por %p54, %p55
    %p57 = scmp.ne.s32.totalorder %s46, %s47
    %p58 = scmp.eq.s32.totalorder %s17, 0
    %p59 = por %p57, %p58
    %p60 = scmp.ne.s32.totalorder %s46, %s47
    %p61 = scmp.eq.s32.totalorder %s18, 3
    %p62 = por %p60, %p61
    %p64 = scmp.ne.s32.totalorder %s47, %s63
    %p65 = scmp.eq.s32.totalorder %s18, 0
    %p66 = por %p64, %p65
    %s68 = sadd.s32 %s67, 1
    %p71 = scmp.eq.s32.totalorder %s12, 3
    %p72 = scmp.ne.s32.totalorder %s67, %s69
    %p73 = scmp.eq.s32.totalorder %s12, 0
    %p74 = por %p72, %p73
    %p75 = scmp.ne.s32.totalorder %s67, %s69
    %p76 = scmp.eq.s32.totalorder %s17, 3
    %p77 = por %p75, %p76
    %p78 = scmp.ne.s32.totalorder %s69, %s70
    %p79 = scmp.eq.s32.totalorder %s17, 0
    %p80 = por %p78, %p79
    %p81 = scmp.ne.s32.totalorder %s69, %s70
    %p82 = scmp.eq.s32.totalorder %s18, 3
    %p83 = por %p81, %p82
    %p85 = scmp.ne.s32.totalorder %s70, %s84
    %p86 = scmp.eq.s32.totalorder %s18, 0
    %p87 = por %p85, %p86
    %s89 = sadd.s32 %s88, 1
    %p92 = scmp.eq.s32.totalorder %s12, 3
    %p93 = scmp.ne.s32.totalorder %s88, %s90
    %p94 = scmp.eq.s32.totalorder %s12, 0
    %p95 = por %p93, %p94
    %p96 = scmp.ne.s32.totalorder %s88, %s90
    %p97 = scmp.eq.s32.totalorder %s17, 3
    %p98 = por %p96, %p97
    %p99 = scmp.ne.s32.totalorder %s90, %s91
    %p100 = scmp.eq.s32.totalorder %s17, 0
    %p101 = por %p99, %p100
    %p102 = scmp.ne.s32.totalorder %s90, %s91
    %p103 = scmp.eq.s32.totalorder %s18, 3
    %p104 = por %p102, %p103
    %p106 = scmp.ne.s32.totalorder %s91, %s105
    %p107 = scmp.eq.s32.totalorder %s18, 0
    %p108 = por %p106, %p107
    %s110 = sadd.s32 %s109, 1
    %p113 = scmp.eq.s32.totalorder %s12, 3
    %p114 = scmp.ne.s32.totalorder %s109, %s111
    %p115 = scmp.eq.s32.totalorder %s12, 0
    %p116 = por %p114, %p115
    %p117 = scmp.ne.s32.totalorder %s109, %s111
    %p118 = scmp.eq.s32.totalorder %s17, 3
    %p119 = por %p117, %p118
    %p120 = scmp.ne.s32.totalorder %s111, %s112
    %p121 = scmp.eq.s32.totalorder %s17, 0
    %p122 = por %p120, %p121
    %p123 = scmp.ne.s32.totalorder %s111, %s112
    %p124 = scmp.eq.s32.totalorder %s18, 3
    %p125 = por %p123, %p124
    %p127 = scmp.ne.s32.totalorder %s112, %s126
    %p128 = scmp.eq.s32.totalorder %s18, 0
    %p129 = por %p127, %p128
    %s131 = sadd.s32 %s130, 1
    %p134 = scmp.eq.s32.totalorder %s12, 3
    %p135 = scmp.ne.s32.totalorder %s130, %s132
    %p136 = scmp.eq.s32.totalorder %s12, 0
    %p137 = por %p135, %p136
    %p138 = scmp.ne.s32.totalorder %s130, %s132
    %p139 = scmp.eq.s32.totalorder %s17, 3
    %p140 = por %p138, %p139
    %p141 = scmp.ne.s32.totalorder %s132, %s133
    %p142 = scmp.eq.s32.totalorder %s17, 0
    %p143 = por %p141, %p142
    %p144 = scmp.ne.s32.totalorder %s132, %s133
    %p145 = scmp.eq.s32.totalorder %s18, 3
    %p146 = por %p144, %p145
    %p148 = scmp.ne.s32.totalorder %s133, %s147
    %p149 = scmp.eq.s32.totalorder %s18, 0
    %p150 = por %p148, %p149
    %s152 = sadd.s32 %s151, 1
    %p155 = scmp.eq.s32.totalorder %s12, 3
    %p156 = scmp.ne.s32.totalorder %s151, %s153
    %p157 = scmp.eq.s32.totalorder %s12, 0
    %p158 = por %p156, %p157
    %p159 = scmp.ne.s32.totalorder %s151, %s153
    %p160 = scmp.eq.s32.totalorder %s17, 3
    %p161 = por %p159, %p160
    %p162 = scmp.ne.s32.totalorder %s153, %s154
    %p163 = scmp.eq.s32.totalorder %s17, 0
    %p164 = por %p162, %p163
    %p165 = scmp.ne.s32.totalorder %s153, %s154
    %p166 = scmp.eq.s32.totalorder %s18, 3
    %p167 = por %p165, %p166
    %p169 = scmp.ne.s32.totalorder %s154, %s168
    %p170 = scmp.eq.s32.totalorder %s18, 0
    %p171 = por %p169, %p170
    %s172 = smul.u32 %s20, %s19
    %s173 = smul.u32 %s21, %s19
    %s174 = smul.u32 %s34, %s38
    %s175 = smul.u32 %s30, %s38
    %s176 = ssub.s32 %s172, %s174
    %s177 = ssub.s32 %s173, %s175
    %s178 = sor.u32 %s176, %s177
    %p179 = scmp.eq.s32.totalorder %s178, 0
    %s181 = sadd.s32 %s180, 1
    %s182 = scalar_select %p179, %s180, %s181
    %p185 = pneg %p179
    %p186 = scmp.eq.s32.totalorder %s12, 3
    %p187 = por %p185, %p186
    %p188 = scmp.ne.s32.totalorder %s180, %s183
    %p189 = scmp.eq.s32.totalorder %s12, 0
    %p190 = por %p188, %p189
    %p191 = scmp.ne.s32.totalorder %s180, %s183
    %p192 = scmp.eq.s32.totalorder %s17, 3
    %p193 = por %p191, %p192
    %p194 = scmp.ne.s32.totalorder %s183, %s184
    %p195 = scmp.eq.s32.totalorder %s17, 0
    %p196 = por %p194, %p195
    %p197 = scmp.ne.s32.totalorder %s183, %s184
    %p198 = scmp.eq.s32.totalorder %s18, 3
    %p199 = por %p197, %p198
    %p201 = scmp.ne.s32.totalorder %s184, %s200
    %p202 = scmp.eq.s32.totalorder %s18, 0
    %p203 = por %p201, %p202
    %p204 = scmp.le.s32.totalorder 1, %s12
    %p205 = scmp.lt.s32.totalorder %s12, 5
    %p206 = pnand %p204, %p205
    %p207 = pneg %p206
    // Predicated region
    $region9: #{downsampler_forward.1} parent=5 // pred_check
      _
    $region10: #{downsampler_forward.1} parent=5 // pred_check_branch
      %209 = sbr.rel (%p206) target = $region12
    $region11: #{downsampler_forward.1} parent=5 // pred_region
      %s210 = ssub.s32 %s12, 1
      // Predicated region
      $region13: #{downsampler_forward.1} parent=11 // pred_check
        %p211 = pneg %p80
      $region14: #{downsampler_forward.1} parent=11 // pred_check_branch
        %213 = sbr.rel (%p211) target = $region16
      $region15: #{downsampler_forward.1} parent=11 // pred_region
        _
      $region16: #{downsampler_forward.1} parent=11 // pred_fallthru
        _
      // Predicated region
      $region17: #{downsampler_forward.1} parent=11 // pred_check
        %p214 = pneg %p101
      $region18: #{downsampler_forward.1} parent=11 // pred_check_branch
        %216 = sbr.rel (%p214) target = $region20
      $region19: #{downsampler_forward.1} parent=11 // pred_region
        _
      $region20: #{downsampler_forward.1} parent=11 // pred_fallthru
        _
      // Predicated region
      $region21: #{downsampler_forward.1} parent=11 // pred_check
        %p217 = pneg %p122
      $region22: #{downsampler_forward.1} parent=11 // pred_check_branch
        %219 = sbr.rel (%p217) target = $region24
      $region23: #{downsampler_forward.1} parent=11 // pred_region
        _
      $region24: #{downsampler_forward.1} parent=11 // pred_fallthru
        _
      // Predicated region
      $region25: #{downsampler_forward.1} parent=11 // pred_check
        %p220 = pneg %p143
      $region26: #{downsampler_forward.1} parent=11 // pred_check_branch
        %222 = sbr.rel (%p220) target = $region28
      $region27: #{downsampler_forward.1} parent=11 // pred_region
        _
      $region28: #{downsampler_forward.1} parent=11 // pred_fallthru
        _
      // Predicated region
      $region29: #{downsampler_forward.1} parent=11 // pred_check
        %p223 = pneg %p164
      $region30: #{downsampler_forward.1} parent=11 // pred_check_branch
        %225 = sbr.rel (%p223) target = $region32
      $region31: #{downsampler_forward.1} parent=11 // pred_region
        _
      $region32: #{downsampler_forward.1} parent=11 // pred_fallthru
        _
    $region12: #{downsampler_forward.1} parent=5 // pred_fallthru
      _
    %p226 = scmp.lt.s32.totalorder %s12, 4
    // Predicated region
    $region33: #{downsampler_forward.1} parent=5 // pred_check
      %p227 = pneg %p226
    $region34: #{downsampler_forward.1} parent=5 // pred_check_branch
      %229 = sbr.rel (%p227) target = $region36
    $region35: #{downsampler_forward.1} parent=5 // pred_region
      // Predicated region
      $region37: #{downsampler_forward.1} parent=35 // pred_check
        %p230 = pneg %p53
      $region38: #{downsampler_forward.1} parent=35 // pred_check_branch
        %232 = sbr.rel (%p230) target = $region40
      $region39: #{downsampler_forward.1} parent=35 // pred_region
        %p233 = scmp.lt.s32.totalorder %s20, 1
        %s234 = scalar_select %p233, %s20, 1
        %p235 = scmp.lt.s32.totalorder %s21, 0
        %s236 = scalar_select %p235, %s21, 0
        %s237 = smul.addr %s234, 9
        %s238 = sadd.s32 %s236, %s237
        %s239 = smul.addr %s238, 2
        %s240 = scalar_lea.vmem %s0, %s239
      $region40: #{downsampler_forward.1} parent=35 // pred_fallthru
        _
    $region36: #{downsampler_forward.1} parent=5 // pred_fallthru
      _
    %p241 = scmp.le.s32.totalorder 1, %s12
    %p242 = scmp.lt.s32.totalorder %s12, 5
    %p243 = pnand %p241, %p242
    %p244 = pneg %p243
    // Predicated region
    $region41: #{downsampler_forward.1} parent=5 // pred_check
      _
    $region42: #{downsampler_forward.1} parent=5 // pred_check_branch
      %246 = sbr.rel (%p243) target = $region44
    $region43: #{downsampler_forward.1} parent=5 // pred_region
      %s247 = ssub.s32 %s12, 1
      %p248 = scmp.lt.s32.totalorder %s23, 1
      %s249 = scalar_select %p248, %s23, 1
      %p250 = scmp.lt.s32.totalorder %s24, 0
      %s251 = scalar_select %p250, %s24, 0
      %s252 = smul.addr %s249, 9
      %s253 = sadd.s32 %s251, %s252
      %s254 = smul.addr %s253, 2
      %s255 = scalar_lea.vmem %s0, %s254
      %p256 = pneg %p59
      %p257 = pneg %p56
      %p258 = pneg %p80
      %p259 = pneg %p77
      %p260 = pneg %p101
      %p261 = pneg %p98
      %p262 = pneg %p122
      %p263 = pneg %p119
      %p264 = pneg %p143
      %p265 = pneg %p140
      %p266 = pneg %p164
      %p267 = pneg %p161
      %p268 = pneg %p196
      %p269 = pneg %p193
      %s270 = smul.u32 %s23, %s22
      %s271 = smul.u32 %s24, %s22
      %p272 = scmp.lt.s32.totalorder %s270, 1
      %s273 = scalar_select %p272, %s270, 1
      %p274 = scmp.lt.s32.totalorder %s271, 0
      %s275 = scalar_select %p274, %s271, 0
      %s276 = smul.addr %s273, 2
      %s277 = sadd.s32 %s275, %s276
      %s278 = smul.addr %s277, 8
      %s279 = scalar_lea.vmem %s6, %s278
      %p280 = scmp.lt.s32.totalorder %s23, 1
      %s281 = scalar_select %p280, %s23, 1
      %p282 = scmp.lt.s32.totalorder %s24, 0
      %s283 = scalar_select %p282, %s24, 0
      %s284 = smul.addr %s281, 9
      %s285 = sadd.s32 %s283, %s284
      %s286 = smul.addr %s285, 2
      %s287 = scalar_lea.vmem %s0, %s286
      %s288 = smul.u32 %s23, %s22
      %s289 = smul.u32 %s24, %s22
      %p290 = scmp.lt.s32.totalorder %s288, 1
      %s291 = scalar_select %p290, %s288, 1
      %p292 = scmp.lt.s32.totalorder %s289, 0
      %s293 = scalar_select %p292, %s289, 0
      %s294 = smul.addr %s291, 2
      %s295 = sadd.s32 %s293, %s294
      %s296 = smul.addr %s295, 8
      %s297 = scalar_lea.vmem %s6, %s296
      %s298 = smul.u32 %s23, %s22
      %s299 = smul.u32 %s24, %s22
      %p301 = scmp.eq.s32.totalorder %s22, 0
      %p302 = scmp.eq.s32.totalorder %s23, 0
      %p303 = pnand %p301, %p302
      %p304 = pneg %p303
      %p305 = scmp.eq.s32.totalorder %s24, 0
      %p306 = pnand %p304, %p305
      %p307 = pneg %p306
      // Predicated region
      $region45: #{downsampler_forward.1} parent=43 // pred_check
        _
      $region46: #{downsampler_forward.1} parent=43 // pred_check_branch
        %309 = sbr.rel (%p306) target = $region48
      $region47: #{downsampler_forward.1} parent=43 // pred_region
        %vm310 = vcmask 3072
        %311 = vst.msk [vmem:[#allocation2] sm:$0xf] %vm310, 0.0
        %312 = vst.msk [vmem:[#allocation3] sm:$0xf] %vm310, 0.0
        %vm313 = vcmask 7168
        %314 = vst.msk [vmem:[#allocation4] sm:$0xff] %vm313, 0.0
        %315 = vst.msk [vmem:[#allocation4 + $0x8] sm:$0xf] %vm310, 0.0
        %316 = vst.msk [vmem:[#allocation5] sm:$0xff] %vm313, 0.0
        %317 = vst.msk [vmem:[#allocation5 + $0x8] sm:$0xf] %vm310, 0.0
      $region48: #{downsampler_forward.1} parent=43 // pred_fallthru
        _
      %v318 = vld [vmem:[%s287] sm:$0x3]
      %v319 = vld [vmem:[%s1] sm:$0xf]
      %v320 = vld [vmem:[%s1 + $0x4] sm:$0x3]
      %s321 = scalar_lea.vmem %s287, 2
      %v322 = vld [vmem:[%s321] sm:$0x3]
      %s323 = scalar_lea.vmem %s1, 8
      %v324 = vld [vmem:[%s323] sm:$0xf]
      %v325 = vld [vmem:[%s323 + $0x4] sm:$0x3]
      %v328 = vunpack.c.l.b16 %v324
      %v329 = vunpack.c.l.b16 %v325
      %v330 = vpack.c.b16 %v329, %v328
      %vm331 = vcmask 31744
      %v333 = vsel %vm331, %v330, 0
      %vm335 = vcmask 1041408
      %v337 = vsel %vm335, %v322, 0
      %339 = vmatprep.subr.bf16.mxu0 0
      %340 = vmatpush1.bf16.msra.mxu0 %v337
      %341 = vmatprep.subr.bf16.mxu0 0
      %342 = vmatpush1.bf16.msra.mxu0 0
      %343 = vmatprep.subr.bf16.mxu0 0
      %344 = vmatpush1.bf16.msra.mxu0 0
      %345 = vmatprep.subr.bf16.mxu0 0
      %346 = vmatpush1.bf16.msra.mxu0 0
      %347 = vmatprep.subr.bf16.mxu0 0
      %348 = vmatpush1.bf16.msra.mxu0 0
      %349 = vmatprep.subr.bf16.mxu0 0
      %350 = vmatpush1.bf16.msra.mxu0 0
      %351 = vmatprep.subr.bf16.mxu0 0
      %352 = vmatpush1.bf16.msra.mxu0 0
      %353 = vmatprep.subr.bf16.mxu0 0
      %354 = vmatpush1.bf16.msra.mxu0 0
      %355 = vmatprep.subr.bf16.mxu0 0
      %356 = vmatpush1.bf16.msra.mxu0 0
      %357 = vmatprep.subr.bf16.mxu0 0
      %358 = vmatpush1.bf16.msra.mxu0 0
      %359 = vmatprep.subr.bf16.mxu0 0
      %360 = vmatpush1.bf16.msra.mxu0 0
      %361 = vmatprep.subr.bf16.mxu0 0
      %362 = vmatpush1.bf16.msra.mxu0 0
      %363 = vmatprep.subr.bf16.mxu0 0
      %364 = vmatpush1.bf16.msra.mxu0 0
      %365 = vmatprep.subr.bf16.mxu0 0
      %366 = vmatpush1.bf16.msra.mxu0 0
      %367 = vmatprep.subr.bf16.mxu0 0
      %368 = vmatpush1.bf16.msra.mxu0 0
      %369 = vmatprep.subr.bf16.mxu0 0
      %370 = vmatpush1.bf16.msra.mxu0 0
      %371 = vmatprep.mubr.bf16.mxu0 0
      %372 = vmatmul.mubr.bf16.gmra.mrb[0].mxu0 %v333
      %v373 = vpop.f32.mrb[0].mxu0
      %v374 = vadd.f32 0.0, %v373
      %v375 = vpop.f32.mrb[0].mxu0
      %v376 = vpop.f32.mrb[0].mxu0
      %v377 = vadd.f32 0.0, %v376
      %v378 = vpop.f32.mrb[0].mxu0
      %379 = vdwg.mxu0
      %v382 = vunpack.c.l.b16 %v319
      %v383 = vunpack.c.l.b16 %v320
      %v384 = vpack.c.b16 %v383, %v382
      %v386 = vsel %vm331, %v384, 0
      %v389 = vsel %vm335, %v318, 0
      %391 = vmatprep.subr.bf16.mxu0 0
      %392 = vmatpush1.bf16.msra.mxu0 %v389
      %393 = vmatprep.subr.bf16.mxu0 0
      %394 = vmatpush1.bf16.msra.mxu0 0
      %395 = vmatprep.subr.bf16.mxu0 0
      %396 = vmatpush1.bf16.msra.mxu0 0
      %397 = vmatprep.subr.bf16.mxu0 0
      %398 = vmatpush1.bf16.msra.mxu0 0
      %399 = vmatprep.subr.bf16.mxu0 0
      %400 = vmatpush1.bf16.msra.mxu0 0
      %401 = vmatprep.subr.bf16.mxu0 0
      %402 = vmatpush1.bf16.msra.mxu0 0
      %403 = vmatprep.subr.bf16.mxu0 0
      %404 = vmatpush1.bf16.msra.mxu0 0
      %405 = vmatprep.subr.bf16.mxu0 0
      %406 = vmatpush1.bf16.msra.mxu0 0
      %407 = vmatprep.subr.bf16.mxu0 0
      %408 = vmatpush1.bf16.msra.mxu0 0
      %409 = vmatprep.subr.bf16.mxu0 0
      %410 = vmatpush1.bf16.msra.mxu0 0
      %411 = vmatprep.subr.bf16.mxu0 0
      %412 = vmatpush1.bf16.msra.mxu0 0
      %413 = vmatprep.subr.bf16.mxu0 0
      %414 = vmatpush1.bf16.msra.mxu0 0
      %415 = vmatprep.subr.bf16.mxu0 0
      %416 = vmatpush1.bf16.msra.mxu0 0
      %417 = vmatprep.subr.bf16.mxu0 0
      %418 = vmatpush1.bf16.msra.mxu0 0
      %419 = vmatprep.subr.bf16.mxu0 0
      %420 = vmatpush1.bf16.msra.mxu0 0
      %421 = vmatprep.subr.bf16.mxu0 0
      %422 = vmatpush1.bf16.msra.mxu0 0
      %423 = vmatprep.mubr.bf16.mxu0 0
      %424 = vmatmul.mubr.bf16.gmra.mrb[0].mxu0 %v386
      %v425 = vpop.f32.mrb[0].mxu0
      %v426 = vadd.f32 %v374, %v425
      %v427 = vpop.f32.mrb[0].mxu0
      %v428 = vpop.f32.mrb[0].mxu0
      %v429 = vadd.f32 %v377, %v428
      %v430 = vpop.f32.mrb[0].mxu0
      %431 = vdwg.mxu0
      %s432 = scalar_lea.vmem %s287, 4
      %v433 = vld [vmem:[%s432] sm:$0x3]
      %s434 = scalar_lea.vmem %s1, 16
      %v435 = vld [vmem:[%s434] sm:$0xf]
      %v436 = vld [vmem:[%s434 + $0x4] sm:$0x3]
      %v439 = vunpack.c.l.b16 %v435
      %v440 = vunpack.c.l.b16 %v436
      %v441 = vpack.c.b16 %v440, %v439
      %v443 = vsel %vm331, %v441, 0
      %v446 = vsel %vm335, %v433, 0
      %448 = vmatprep.subr.bf16.mxu0 0
      %449 = vmatpush1.bf16.msra.mxu0 %v446
      %450 = vmatprep.subr.bf16.mxu0 0
      %451 = vmatpush1.bf16.msra.mxu0 0
      %452 = vmatprep.subr.bf16.mxu0 0
      %453 = vmatpush1.bf16.msra.mxu0 0
      %454 = vmatprep.subr.bf16.mxu0 0
      %455 = vmatpush1.bf16.msra.mxu0 0
      %456 = vmatprep.subr.bf16.mxu0 0
      %457 = vmatpush1.bf16.msra.mxu0 0
      %458 = vmatprep.subr.bf16.mxu0 0
      %459 = vmatpush1.bf16.msra.mxu0 0
      %460 = vmatprep.subr.bf16.mxu0 0
      %461 = vmatpush1.bf16.msra.mxu0 0
      %462 = vmatprep.subr.bf16.mxu0 0
      %463 = vmatpush1.bf16.msra.mxu0 0
      %464 = vmatprep.subr.bf16.mxu0 0
      %465 = vmatpush1.bf16.msra.mxu0 0
      %466 = vmatprep.subr.bf16.mxu0 0
      %467 = vmatpush1.bf16.msra.mxu0 0
      %468 = vmatprep.subr.bf16.mxu0 0
      %469 = vmatpush1.bf16.msra.mxu0 0
      %470 = vmatprep.subr.bf16.mxu0 0
      %471 = vmatpush1.bf16.msra.mxu0 0
      %472 = vmatprep.subr.bf16.mxu0 0
      %473 = vmatpush1.bf16.msra.mxu0 0
      %474 = vmatprep.subr.bf16.mxu0 0
      %475 = vmatpush1.bf16.msra.mxu0 0
      %476 = vmatprep.subr.bf16.mxu0 0
      %477 = vmatpush1.bf16.msra.mxu0 0
      %478 = vmatprep.subr.bf16.mxu0 0
      %479 = vmatpush1.bf16.msra.mxu0 0
      %480 = vmatprep.mubr.bf16.mxu0 0
      %481 = vmatmul.mubr.bf16.gmra.mrb[0].mxu0 %v443
      %v482 = vpop.f32.mrb[0].mxu0
      %v483 = vadd.f32 0.0, %v482
      %v484 = vpop.f32.mrb[0].mxu0
      %v485 = vpop.f32.mrb[0].mxu0
      %v486 = vadd.f32 0.0, %v485
      %v487 = vpop.f32.mrb[0].mxu0
      %488 = vdwg.mxu0
      %v489 = vadd.f32 %v426, %v483
      %v490 = vadd.f32 %v429, %v486
      %s491 = scalar_lea.vmem %s287, 6
      %v492 = vld [vmem:[%s491] sm:$0x3]
      %s493 = scalar_lea.vmem %s1, 24
      %v494 = vld [vmem:[%s493] sm:$0xf]
      %v495 = vld [vmem:[%s493 + $0x4] sm:$0x3]
      %v498 = vunpack.c.l.b16 %v494
      %v499 = vunpack.c.l.b16 %v495
      %v500 = vpack.c.b16 %v499, %v498
      %v502 = vsel %vm331, %v500, 0
      %v505 = vsel %vm335, %v492, 0
      %507 = vmatprep.subr.bf16.mxu0 0
      %508 = vmatpush1.bf16.msra.mxu0 %v505
      %509 = vmatprep.subr.bf16.mxu0 0
      %510 = vmatpush1.bf16.msra.mxu0 0
      %511 = vmatprep.subr.bf16.mxu0 0
      %512 = vmatpush1.bf16.msra.mxu0 0
      %513 = vmatprep.subr.bf16.mxu0 0
      %514 = vmatpush1.bf16.msra.mxu0 0
      %515 = vmatprep.subr.bf16.mxu0 0
      %516 = vmatpush1.bf16.msra.mxu0 0
      %517 = vmatprep.subr.bf16.mxu0 0
      %518 = vmatpush1.bf16.msra.mxu0 0
      %519 = vmatprep.subr.bf16.mxu0 0
      %520 = vmatpush1.bf16.msra.mxu0 0
      %521 = vmatprep.subr.bf16.mxu0 0
      %522 = vmatpush1.bf16.msra.mxu0 0
      %523 = vmatprep.subr.bf16.mxu0 0
      %524 = vmatpush1.bf16.msra.mxu0 0
      %525 = vmatprep.subr.bf16.mxu0 0
      %526 = vmatpush1.bf16.msra.mxu0 0
      %527 = vmatprep.subr.bf16.mxu0 0
      %528 = vmatpush1.bf16.msra.mxu0 0
      %529 = vmatprep.subr.bf16.mxu0 0
      %530 = vmatpush1.bf16.msra.mxu0 0
      %531 = vmatprep.subr.bf16.mxu0 0
      %532 = vmatpush1.bf16.msra.mxu0 0
      %533 = vmatprep.subr.bf16.mxu0 0
      %534 = vmatpush1.bf16.msra.mxu0 0
      %535 = vmatprep.subr.bf16.mxu0 0
      %536 = vmatpush1.bf16.msra.mxu0 0
      %537 = vmatprep.subr.bf16.mxu0 0
      %538 = vmatpush1.bf16.msra.mxu0 0
      %539 = vmatprep.mubr.bf16.mxu0 0
      %540 = vmatmul.mubr.bf16.gmra.mrb[0].mxu0 %v502
      %v541 = vpop.f32.mrb[0].mxu0
      %v542 = vadd.f32 0.0, %v541
      %v543 = vpop.f32.mrb[0].mxu0
      %v544 = vpop.f32.mrb[0].mxu0
      %v545 = vadd.f32 0.0, %v544
      %v546 = vpop.f32.mrb[0].mxu0
      %547 = vdwg.mxu0
      %v548 = vadd.f32 %v489, %v542
      %v549 = vadd.f32 %v490, %v545
      %s550 = scalar_lea.vmem %s287, 8
      %v551 = vld [vmem:[%s550] sm:$0x3]
      %s552 = scalar_lea.vmem %s1, 32
      %v553 = vld [vmem:[%s552] sm:$0xf]
      %v554 = vld [vmem:[%s552 + $0x4] sm:$0x3]
      %v557 = vunpack.c.l.b16 %v553
      %v558 = vunpack.c.l.b16 %v554
      %v559 = vpack.c.b16 %v558, %v557
      %v561 = vsel %vm331, %v559, 0
      %v564 = vsel %vm335, %v551, 0
      %566 = vmatprep.subr.bf16.mxu0 0
      %567 = vmatpush1.bf16.msra.mxu0 %v564
      %568 = vmatprep.subr.bf16.mxu0 0
      %569 = vmatpush1.bf16.msra.mxu0 0
      %570 = vmatprep.subr.bf16.mxu0 0
      %571 = vmatpush1.bf16.msra.mxu0 0
      %572 = vmatprep.subr.bf16.mxu0 0
      %573 = vmatpush1.bf16.msra.mxu0 0
      %574 = vmatprep.subr.bf16.mxu0 0
      %575 = vmatpush1.bf16.msra.mxu0 0
      %576 = vmatprep.subr.bf16.mxu0 0
      %577 = vmatpush1.bf16.msra.mxu0 0
      %578 = vmatprep.subr.bf16.mxu0 0
      %579 = vmatpush1.bf16.msra.mxu0 0
      %580 = vmatprep.subr.bf16.mxu0 0
      %581 = vmatpush1.bf16.msra.mxu0 0
      %582 = vmatprep.subr.bf16.mxu0 0
      %583 = vmatpush1.bf16.msra.mxu0 0
      %584 = vmatprep.subr.bf16.mxu0 0
      %585 = vmatpush1.bf16.msra.mxu0 0
      %586 = vmatprep.subr.bf16.mxu0 0
      %587 = vmatpush1.bf16.msra.mxu0 0
      %588 = vmatprep.subr.bf16.mxu0 0
      %589 = vmatpush1.bf16.msra.mxu0 0
      %590 = vmatprep.subr.bf16.mxu0 0
      %591 = vmatpush1.bf16.msra.mxu0 0
      %592 = vmatprep.subr.bf16.mxu0 0
      %593 = vmatpush1.bf16.msra.mxu0 0
      %594 = vmatprep.subr.bf16.mxu0 0
      %595 = vmatpush1.bf16.msra.mxu0 0
      %596 = vmatprep.subr.bf16.mxu0 0
      %597 = vmatpush1.bf16.msra.mxu0 0
      %598 = vmatprep.mubr.bf16.mxu0 0
      %599 = vmatmul.mubr.bf16.gmra.mrb[0].mxu0 %v561
      %v600 = vpop.f32.mrb[0].mxu0
      %v601 = vadd.f32 0.0, %v600
      %v602 = vpop.f32.mrb[0].mxu0
      %v603 = vpop.f32.mrb[0].mxu0
      %v604 = vadd.f32 0.0, %v603
      %v605 = vpop.f32.mrb[0].mxu0
      %606 = vdwg.mxu0
      %v607 = vadd.f32 %v548, %v601
      %v608 = vadd.f32 %v549, %v604
      %s609 = scalar_lea.vmem %s287, 10
      %v610 = vld [vmem:[%s609] sm:$0x3]
      %s611 = scalar_lea.vmem %s1, 40
      %v612 = vld [vmem:[%s611] sm:$0xf]
      %v613 = vld [vmem:[%s611 + $0x4] sm:$0x3]
      %v616 = vunpack.c.l.b16 %v612
      %v617 = vunpack.c.l.b16 %v613
      %v618 = vpack.c.b16 %v617, %v616
      %v620 = vsel %vm331, %v618, 0
      %v623 = vsel %vm335, %v610, 0
      %625 = vmatprep.subr.bf16.mxu0 0
      %626 = vmatpush1.bf16.msra.mxu0 %v623
      %627 = vmatprep.subr.bf16.mxu0 0
      %628 = vmatpush1.bf16.msra.mxu0 0
      %629 = vmatprep.subr.bf16.mxu0 0
      %630 = vmatpush1.bf16.msra.mxu0 0
      %631 = vmatprep.subr.bf16.mxu0 0
      %632 = vmatpush1.bf16.msra.mxu0 0
      %633 = vmatprep.subr.bf16.mxu0 0
      %634 = vmatpush1.bf16.msra.mxu0 0
      %635 = vmatprep.subr.bf16.mxu0 0
      %636 = vmatpush1.bf16.msra.mxu0 0
      %637 = vmatprep.subr.bf16.mxu0 0
      %638 = vmatpush1.bf16.msra.mxu0 0
      %639 = vmatprep.subr.bf16.mxu0 0
      %640 = vmatpush1.bf16.msra.mxu0 0
      %641 = vmatprep.subr.bf16.mxu0 0
      %642 = vmatpush1.bf16.msra.mxu0 0
      %643 = vmatprep.subr.bf16.mxu0 0
      %644 = vmatpush1.bf16.msra.mxu0 0
      %645 = vmatprep.subr.bf16.mxu0 0
      %646 = vmatpush1.bf16.msra.mxu0 0
      %647 = vmatprep.subr.bf16.mxu0 0
      %648 = vmatpush1.bf16.msra.mxu0 0
      %649 = vmatprep.subr.bf16.mxu0 0
      %650 = vmatpush1.bf16.msra.mxu0 0
      %651 = vmatprep.subr.bf16.mxu0 0
      %652 = vmatpush1.bf16.msra.mxu0 0
      %653 = vmatprep.subr.bf16.mxu0 0
      %654 = vmatpush1.bf16.msra.mxu0 0
      %655 = vmatprep.subr.bf16.mxu0 0
      %656 = vmatpush1.bf16.msra.mxu0 0
      %657 = vmatprep.mubr.bf16.mxu0 0
      %658 = vmatmul.mubr.bf16.gmra.mrb[0].mxu0 %v620
      %v659 = vpop.f32.mrb[0].mxu0
      %v660 = vadd.f32 0.0, %v659
      %v661 = vpop.f32.mrb[0].mxu0
      %v662 = vpop.f32.mrb[0].mxu0
      %v663 = vadd.f32 0.0, %v662
      %v664 = vpop.f32.mrb[0].mxu0
      %665 = vdwg.mxu0
      %v666 = vadd.f32 %v607, %v660
      %v667 = vadd.f32 %v608, %v663
      %s668 = scalar_lea.vmem %s287, 12
      %v669 = vld [vmem:[%s668] sm:$0x3]
      %s670 = scalar_lea.vmem %s1, 48
      %v671 = vld [vmem:[%s670] sm:$0xf]
      %v672 = vld [vmem:[%s670 + $0x4] sm:$0x3]
      %v675 = vunpack.c.l.b16 %v671
      %v676 = vunpack.c.l.b16 %v672
      %v677 = vpack.c.b16 %v676, %v675
      %v679 = vsel %vm331, %v677, 0
      %v682 = vsel %vm335, %v669, 0
      %684 = vmatprep.subr.bf16.mxu0 0
      %685 = vmatpush1.bf16.msra.mxu0 %v682
      %686 = vmatprep.subr.bf16.mxu0 0
      %687 = vmatpush1.bf16.msra.mxu0 0
      %688 = vmatprep.subr.bf16.mxu0 0
      %689 = vmatpush1.bf16.msra.mxu0 0
      %690 = vmatprep.subr.bf16.mxu0 0
      %691 = vmatpush1.bf16.msra.mxu0 0
      %692 = vmatprep.subr.bf16.mxu0 0
      %693 = vmatpush1.bf16.msra.mxu0 0
      %694 = vmatprep.subr.bf16.mxu0 0
      %695 = vmatpush1.bf16.msra.mxu0 0
      %696 = vmatprep.subr.bf16.mxu0 0
      %697 = vmatpush1.bf16.msra.mxu0 0
      %698 = vmatprep.subr.bf16.mxu0 0
      %699 = vmatpush1.bf16.msra.mxu0 0
      %700 = vmatprep.subr.bf16.mxu0 0
      %701 = vmatpush1.bf16.msra.mxu0 0
      %702 = vmatprep.subr.bf16.mxu0 0
      %703 = vmatpush1.bf16.msra.mxu0 0
      %704 = vmatprep.subr.bf16.mxu0 0
      %705 = vmatpush1.bf16.msra.mxu0 0
      %706 = vmatprep.subr.bf16.mxu0 0
      %707 = vmatpush1.bf16.msra.mxu0 0
      %708 = vmatprep.subr.bf16.mxu0 0
      %709 = vmatpush1.bf16.msra.mxu0 0
      %710 = vmatprep.subr.bf16.mxu0 0
      %711 = vmatpush1.bf16.msra.mxu0 0
      %712 = vmatprep.subr.bf16.mxu0 0
      %713 = vmatpush1.bf16.msra.mxu0 0
      %714 = vmatprep.subr.bf16.mxu0 0
      %715 = vmatpush1.bf16.msra.mxu0 0
      %716 = vmatprep.mubr.bf16.mxu0 0
      %717 = vmatmul.mubr.bf16.gmra.mrb[0].mxu0 %v679
      %v718 = vpop.f32.mrb[0].mxu0
      %v719 = vadd.f32 0.0, %v718
      %v720 = vpop.f32.mrb[0].mxu0
      %v721 = vpop.f32.mrb[0].mxu0
      %v722 = vadd.f32 0.0, %v721
      %v723 = vpop.f32.mrb[0].mxu0
      %724 = vdwg.mxu0
      %v725 = vadd.f32 %v666, %v719
      %v726 = vadd.f32 %v667, %v722
      %s727 = scalar_lea.vmem %s287, 14
      %v728 = vld [vmem:[%s727] sm:$0x3]
      %s729 = scalar_lea.vmem %s1, 56
      %v730 = vld [vmem:[%s729] sm:$0xf]
      %v731 = vld [vmem:[%s729 + $0x4] sm:$0x3]
      %v734 = vunpack.c.l.b16 %v730
      %v735 = vunpack.c.l.b16 %v731
      %v736 = vpack.c.b16 %v735, %v734
      %v738 = vsel %vm331, %v736, 0
      %v741 = vsel %vm335, %v728, 0
      %743 = vmatprep.subr.bf16.mxu0 0
      %744 = vmatpush1.bf16.msra.mxu0 %v741
      %745 = vmatprep.subr.bf16.mxu0 0
      %746 = vmatpush1.bf16.msra.mxu0 0
      %747 = vmatprep.subr.bf16.mxu0 0
      %748 = vmatpush1.bf16.msra.mxu0 0
      %749 = vmatprep.subr.bf16.mxu0 0
      %750 = vmatpush1.bf16.msra.mxu0 0
      %751 = vmatprep.subr.bf16.mxu0 0
      %752 = vmatpush1.bf16.msra.mxu0 0
      %753 = vmatprep.subr.bf16.mxu0 0
      %754 = vmatpush1.bf16.msra.mxu0 0
      %755 = vmatprep.subr.bf16.mxu0 0
      %756 = vmatpush1.bf16.msra.mxu0 0
      %757 = vmatprep.subr.bf16.mxu0 0
      %758 = vmatpush1.bf16.msra.mxu0 0
      %759 = vmatprep.subr.bf16.mxu0 0
      %760 = vmatpush1.bf16.msra.mxu0 0
      %761 = vmatprep.subr.bf16.mxu0 0
      %762 = vmatpush1.bf16.msra.mxu0 0
      %763 = vmatprep.subr.bf16.mxu0 0
      %764 = vmatpush1.bf16.msra.mxu0 0
      %765 = vmatprep.subr.bf16.mxu0 0
      %766 = vmatpush1.bf16.msra.mxu0 0
      %767 = vmatprep.subr.bf16.mxu0 0
      %768 = vmatpush1.bf16.msra.mxu0 0
      %769 = vmatprep.subr.bf16.mxu0 0
      %770 = vmatpush1.bf16.msra.mxu0 0
      %771 = vmatprep.subr.bf16.mxu0 0
      %772 = vmatpush1.bf16.msra.mxu0 0
      %773 = vmatprep.subr.bf16.mxu0 0
      %774 = vmatpush1.bf16.msra.mxu0 0
      %775 = vmatprep.mubr.bf16.mxu0 0
      %776 = vmatmul.mubr.bf16.gmra.mrb[0].mxu0 %v738
      %v777 = vpop.f32.mrb[0].mxu0
      %v778 = vadd.f32 0.0, %v777
      %v779 = vpop.f32.mrb[0].mxu0
      %v780 = vpop.f32.mrb[0].mxu0
      %v781 = vadd.f32 0.0, %v780
      %v782 = vpop.f32.mrb[0].mxu0
      %783 = vdwg.mxu0
      %v784 = vadd.f32 %v725, %v778
      %v785 = vadd.f32 %v726, %v781
      %s786 = scalar_lea.vmem %s287, 16
      %v787 = vld [vmem:[%s786] sm:$0x3]
      %s788 = scalar_lea.vmem %s1, 64
      %v789 = vld [vmem:[%s788] sm:$0xf]
      %v790 = vld [vmem:[%s788 + $0x4] sm:$0x3]
      %v793 = vunpack.c.l.b16 %v789
      %v794 = vunpack.c.l.b16 %v790
      %v795 = vpack.c.b16 %v794, %v793
      %v797 = vsel %vm331, %v795, 0
      %v800 = vsel %vm335, %v787, 0
      %802 = vmatprep.subr.bf16.mxu0 0
      %803 = vmatpush1.bf16.msra.mxu0 %v800
      %804 = vmatprep.subr.bf16.mxu0 0
      %805 = vmatpush1.bf16.msra.mxu0 0
      %806 = vmatprep.subr.bf16.mxu0 0
      %807 = vmatpush1.bf16.msra.mxu0 0
      %808 = vmatprep.subr.bf16.mxu0 0
      %809 = vmatpush1.bf16.msra.mxu0 0
      %810 = vmatprep.subr.bf16.mxu0 0
      %811 = vmatpush1.bf16.msra.mxu0 0
      %812 = vmatprep.subr.bf16.mxu0 0
      %813 = vmatpush1.bf16.msra.mxu0 0
      %814 = vmatprep.subr.bf16.mxu0 0
      %815 = vmatpush1.bf16.msra.mxu0 0
      %816 = vmatprep.subr.bf16.mxu0 0
      %817 = vmatpush1.bf16.msra.mxu0 0
      %818 = vmatprep.subr.bf16.mxu0 0
      %819 = vmatpush1.bf16.msra.mxu0 0
      %820 = vmatprep.subr.bf16.mxu0 0
      %821 = vmatpush1.bf16.msra.mxu0 0
      %822 = vmatprep.subr.bf16.mxu0 0
      %823 = vmatpush1.bf16.msra.mxu0 0
      %824 = vmatprep.subr.bf16.mxu0 0
      %825 = vmatpush1.bf16.msra.mxu0 0
      %826 = vmatprep.subr.bf16.mxu0 0
      %827 = vmatpush1.bf16.msra.mxu0 0
      %828 = vmatprep.subr.bf16.mxu0 0
      %829 = vmatpush1.bf16.msra.mxu0 0
      %830 = vmatprep.subr.bf16.mxu0 0
      %831 = vmatpush1.bf16.msra.mxu0 0
      %832 = vmatprep.subr.bf16.mxu0 0
      %833 = vmatpush1.bf16.msra.mxu0 0
      %834 = vmatprep.mubr.bf16.mxu0 0
      %835 = vmatmul.mubr.bf16.gmra.mrb[0].mxu0 %v797
      %v836 = vpop.f32.mrb[0].mxu0
      %v837 = vadd.f32 0.0, %v836
      %v838 = vpop.f32.mrb[0].mxu0
      %v839 = vpop.f32.mrb[0].mxu0
      %v840 = vadd.f32 0.0, %v839
      %v841 = vpop.f32.mrb[0].mxu0
      %842 = vdwg.mxu0
      %v843 = vadd.f32 %v784, %v837
      %v844 = vadd.f32 %v785, %v840
      %v845 = vmax.bf16 %v551, %v610
      %v846 = vmax.bf16 %v728, %v787
      %v847 = vmax.bf16 %v845, %v846
      %v848 = vunpack.c.l.bf16 %v847
      // Predicated region
      $region49: #{downsampler_forward.1} parent=43 // pred_check
        %p849 = pneg %p301
      $region50: #{downsampler_forward.1} parent=43 // pred_check_branch
        %851 = sbr.rel (%p849) target = $region52
      $region51: #{downsampler_forward.1} parent=43 // pred_region
        %v852 = vld [vmem:[#allocation2] sm:$0xf]
        %vm853 = vcmask 519168
        %v854 = vsel %vm853, %v848, 0.0
        %855 = vadd.xlane.f32.xlu0 %v854
        %v856 = vpop.xlane.xlu0 %855
        %v857 = vadd.f32 %v852, %v856
        %vm858 = vcmask 3072
        %859 = vst.msk [vmem:[#allocation2] sm:$0xf] %vm858, %v857
        %v860 = vld [vmem:[#allocation3] sm:$0xf]
        %v861 = vmul.f32 %v848, %v848
        %v862 = vsel %vm853, %v861, 0.0
        %863 = vadd.xlane.f32.xlu0 %v862
        %v864 = vpop.xlane.xlu0 %863
        %v865 = vadd.f32 %v860, %v864
        %866 = vst.msk [vmem:[#allocation3] sm:$0xf] %vm858, %v865
        %v867 = vld [vmem:[#allocation4] sm:$0xff]
        %v868 = vld [vmem:[#allocation4 + $0x8] sm:$0xf]
        %vm869 = vcmask 523264
        %v870 = vsel %vm869, %v843, 0.0
        %871 = vadd.xlane.f32.xlu0 %v870
        %v872 = vpop.xlane.xlu0 %871
        %v873 = vsel %vm853, %v844, 0.0
        %874 = vadd.xlane.f32.xlu0 %v873
        %v875 = vpop.xlane.xlu0 %874
        %v876 = vadd.f32 %v867, %v872
        %v877 = vadd.f32 %v868, %v875
        %vm878 = vcmask 7168
        %879 = vst.msk [vmem:[#allocation4] sm:$0xff] %vm878, %v876
        %880 = vst.msk [vmem:[#allocation4 + $0x8] sm:$0xf] %vm858, %v877
        %v881 = vld [vmem:[#allocation5] sm:$0xff]
        %v882 = vld [vmem:[#allocation5 + $0x8] sm:$0xf]
        %v883 = vmul.f32 %v843, %v843
        %v884 = vmul.f32 %v844, %v844
        %v885 = vsel %vm869, %v883, 0.0
        %886 = vadd.xlane.f32.xlu0 %v885
        %v887 = vpop.xlane.xlu0 %886
        %v888 = vsel %vm853, %v884, 0.0
        %889 = vadd.xlane.f32.xlu0 %v888
        %v890 = vpop.xlane.xlu0 %889
        %v891 = vadd.f32 %v881, %v887
        %v892 = vadd.f32 %v882, %v890
        %893 = vst.msk [vmem:[#allocation5] sm:$0xff] %vm878, %v891
        %894 = vst.msk [vmem:[#allocation5 + $0x8] sm:$0xf] %vm858, %v892
      $region52: #{downsampler_forward.1} parent=43 // pred_fallthru
        _
      %p895 = scmp.eq.s32.totalorder %s22, 1
      // Predicated region
      $region53: #{downsampler_forward.1} parent=43 // pred_check
        %p896 = pneg %p895
      $region54: #{downsampler_forward.1} parent=43 // pred_check_branch
        %898 = sbr.rel (%p896) target = $region56
      $region55: #{downsampler_forward.1} parent=43 // pred_region
        %v899 = vld [vmem:[#allocation2] sm:$0xf]
        %v900 = vmul.f32 %v899, 0.0078125
        %v901 = vld [vmem:[#allocation3] sm:$0xf]
        %v902 = vmul.f32 %v901, 0.0078125
        %v903 = vmul.f32 %v900, %v900
        %v904 = vsub.f32 %v902, %v903
        %v905 = vld [vmem:[%s2] sm:$0xf]
        %v906 = vadd.f32 %v904, 1e-05
        %v907 = vrsqrt.pop %v906
        %v908 = vmul.f32 %v905, %v907
        %v909 = vld [vmem:[%s3] sm:$0xf]
        %v910 = vmul.f32 %v900, %v908
        %v911 = vsub.f32 %v909, %v910
        %v912 = vld [vmem:[#allocation4] sm:$0xff]
        %v913 = vld [vmem:[#allocation4 + $0x8] sm:$0xf]
        %v914 = vmul.f32 %v912, 0.0078125
        %v915 = vmul.f32 %v913, 0.0078125
        %v916 = vld [vmem:[#allocation5] sm:$0xff]
        %v917 = vld [vmem:[#allocation5 + $0x8] sm:$0xf]
        %v918 = vmul.f32 %v916, 0.0078125
        %v919 = vmul.f32 %v917, 0.0078125
        %v920 = vmul.f32 %v914, %v914
        %v921 = vmul.f32 %v915, %v915
        %v922 = vsub.f32 %v918, %v920
        %v923 = vsub.f32 %v919, %v921
        %v924 = vld [vmem:[%s4] sm:$0xff]
        %v925 = vld [vmem:[%s4 + $0x8] sm:$0xf]
        %v926 = vadd.f32 %v922, 1e-05
        %v927 = vadd.f32 %v923, 1e-05
        %v928 = vrsqrt.pop %v926
        %v929 = vrsqrt.pop %v927
        %v930 = vmul.f32 %v924, %v928
        %v931 = vmul.f32 %v925, %v929
        %v932 = vld [vmem:[%s5] sm:$0xff]
        %v933 = vld [vmem:[%s5 + $0x8] sm:$0xf]
        %v934 = vmul.f32 %v914, %v930
        %v935 = vmul.f32 %v915, %v931
        %v936 = vsub.f32 %v932, %v934
        %v937 = vsub.f32 %v933, %v935
        %939 = vset.pattern.permute.xlu0 0
        %940 = vperm.xlu0 %939, %v908
        %v941 = vpop.permute.xlu0 %940
        %v943 = vmul.f32 %v848, %v941
        %945 = vset.pattern.permute.xlu0 0
        %946 = vperm.xlu0 %945, %v911
        %v947 = vpop.permute.xlu0 %946
        %v949 = vadd.f32 %v943, %v947
        %v950 = vmax.f32 %v949, 0.0
        %vm951 = vcmask 519168
        %952 = vst.msk [vmem:[%s297] sm:$0xf] %vm951, %v950
        %954 = vset.pattern.permute.xlu0 0
        %955 = vperm.xlu0 %954, %v930
        %v956 = vpop.permute.xlu0 %955
        %959 = vset.pattern.permute.xlu0 0
        %960 = vperm.xlu0 %959, %v931
        %v961 = vpop.permute.xlu0 %960
        %v963 = vmul.f32 %v843, %v956
        %v964 = vmul.f32 %v844, %v961
        %966 = vset.pattern.permute.xlu0 0
        %967 = vperm.xlu0 %966, %v936
        %v968 = vpop.permute.xlu0 %967
        %971 = vset.pattern.permute.xlu0 0
        %972 = vperm.xlu0 %971, %v937
        %v973 = vpop.permute.xlu0 %972
        %v975 = vadd.f32 %v963, %v968
        %v976 = vadd.f32 %v964, %v973
        %v977 = vmax.f32 %v975, 0.0
        %v978 = vmax.f32 %v976, 0.0
        %vm979 = vcmask 523264
        %980 = vst.msk [vmem:[%s297 + $0x4] sm:$0xff] %vm979, %v977
        %981 = vst.msk [vmem:[%s297 + $0xc] sm:$0xf] %vm951, %v978
      $region56: #{downsampler_forward.1} parent=43 // pred_fallthru
        _
      %s982 = smul.u32 %s23, %s22
      %s983 = smul.u32 %s24, %s22
      %p984 = scmp.lt.s32.totalorder %s982, 1
      %s985 = scalar_select %p984, %s982, 1
      %p986 = scmp.lt.s32.totalorder %s983, 0
      %s987 = scalar_select %p986, %s983, 0
      %s988 = smul.addr %s985, 2
      %s989 = sadd.s32 %s987, %s988
      %s990 = smul.addr %s989, 8
      %s991 = scalar_lea.vmem %s6, %s990
      // Predicated region
      $region57: #{downsampler_forward.1} parent=43 // pred_check
        %p992 = pneg %p193
      $region58: #{downsampler_forward.1} parent=43 // pred_check_branch
        %994 = sbr.rel (%p992) target = $region60
      $region59: #{downsampler_forward.1} parent=43 // pred_region
        %s995 = smul.u32 %s23, %s22
        %s996 = smul.u32 %s24, %s22
      $region60: #{downsampler_forward.1} parent=43 // pred_fallthru
        _
    $region44: #{downsampler_forward.1} parent=5 // pred_fallthru
      _
    %p997 = scmp.le.s32.totalorder 2, %s12
    // Predicated region
    $region61: #{downsampler_forward.1} parent=5 // pred_check
      %p998 = pneg %p997
    $region62: #{downsampler_forward.1} parent=5 // pred_check_branch
      %1000 = sbr.rel (%p998) target = $region64
    $region63: #{downsampler_forward.1} parent=5 // pred_region
      %s1001 = ssub.s32 %s12, 2
      // Predicated region
      $region65: #{downsampler_forward.1} parent=63 // pred_check
        %p1002 = pneg %p199
      $region66: #{downsampler_forward.1} parent=63 // pred_check_branch
        %1004 = sbr.rel (%p1002) target = $region68
      $region67: #{downsampler_forward.1} parent=63 // pred_region
        %s1005 = smul.u32 %s26, %s25
        %s1006 = smul.u32 %s27, %s25
        %p1007 = scmp.lt.s32.totalorder %s1005, 1
        %s1008 = scalar_select %p1007, %s1005, 1
        %p1009 = scmp.lt.s32.totalorder %s1006, 0
        %s1010 = scalar_select %p1009, %s1006, 0
        %s1011 = smul.addr %s1008, 2
        %s1012 = sadd.s32 %s1010, %s1011
        %s1013 = smul.addr %s1012, 8
        %s1014 = scalar_lea.vmem %s6, %s1013
      $region68: #{downsampler_forward.1} parent=63 // pred_fallthru
        _
    $region64: #{downsampler_forward.1} parent=5 // pred_fallthru
      _
  $region6: #{downsampler_forward.1} parent=0 // loop_footer
    %s16 = sadd.s32 1, %s12
  $region7: #{downsampler_forward.1} parent=0 // loop_footer_branch
    %11 = sbr.rel target = $region3
  $region8: #{downsampler_forward.1} parent=0 // loop_exit
    _

</llo_original>
